<compile_context>
chip_gen: v7x
topology: tpu7x:2x2x1
jax: 0.10.0
libtpu: 0.0.40
codegen_flags: <defaults>
</compile_context>

<pallas_src>
import functools

import jax
import jax.numpy as jnp
from jax.experimental import pallas as pl
from jax.experimental.pallas import tpu as pltpu


def text_sa_kernel(local_ref, rawg_ref,
                   wl_ref, bl_ref, wg_ref, bg_ref, wcv_ref,
                   newg_ref, weights_ref):
    TB, L, D = local_ref.shape
    Lp = weights_ref.shape[1]            # lane-padded word axis (multiple of 128)

    local = local_ref[...]               # (TB, L, D), native dtype
    rawg = rawg_ref[...]                 # (TB, D),    native dtype

    # ---- MXU matmuls: bf16 operands (weights pre-cast), f32 accumulation ----
    # Reshape BEFORE the bf16 cast: the (TB, L, D) -> (TB*L, D) merge is a free
    # sublane merge in the 8-sublane f32 layout when L % 8 == 0.
    lf = local.reshape(TB * L, D).astype(jnp.bfloat16)
    l_emb = jnp.tanh(
        jnp.dot(lf, wl_ref[...], preferred_element_type=jnp.float32)
        + bl_ref[...]).reshape(TB, L, D)                       # (TB, L, D) f32

    g_emb = jnp.tanh(
        jnp.dot(rawg.astype(jnp.bfloat16), wg_ref[...],
                preferred_element_type=jnp.float32)
        + bg_ref[...])                                         # (TB, D) f32

    # ---- folded embedding_common + softmax over words (f32) -----------------
    # scores = (l_emb * g_emb) @ wc  ==  sum_d l_emb * (g_emb * wc); bc dropped
    # (uniform shift -> softmax no-op; keep this invariant if scores are ever
    # exported separately).
    gw = g_emb * wcv_ref[...]                                  # (TB, D)
    scores = jnp.sum(l_emb * gw[:, None, :], axis=-1)          # (TB, L)

    m = jnp.max(scores, axis=1, keepdims=True)
    e = jnp.exp(scores - m)
    weights = e * pl.reciprocal(jnp.sum(e, axis=1, keepdims=True), approx=True)

    # ---- new_global = sum_L weights * local, then l2norm (f32) --------------
    new_global = jnp.sum(weights[:, :, None] * local.astype(jnp.float32), axis=1)
    sumsq = jnp.sum(new_global * new_global, axis=-1, keepdims=True)
    inv_norm = pl.reciprocal(jnp.sqrt(sumsq) + 1e-8, approx=True)
    new_global = new_global * inv_norm

    newg_ref[...] = new_global.astype(newg_ref.dtype)

    # Lane-dense output slab: the HBM writeback DMAs the full (TB, Lp) block
    # (unmasked vst); only the cheap in-VMEM slice store is masked.
    if Lp == L:
        weights_ref[...] = weights.astype(weights_ref.dtype)
    else:
        weights_ref[...] = jnp.zeros((TB, Lp), dtype=weights_ref.dtype)
        weights_ref[:, :L] = weights.astype(weights_ref.dtype)


def _const_spec(shape):
    """Resident operand (constant index_map): request single buffering."""
    idx = lambda i: (0,) * len(shape)
    try:
        return pl.BlockSpec(shape, idx, pipeline_mode=pl.Buffered(1))
    except Exception:  # older jax without pipeline_mode on BlockSpec
        return pl.BlockSpec(shape, idx)


def _choose_block_b(B, L, D, block_b, vmem_limit_bytes, local_itemsize):
    """Pick the batch tile: VMEM-budgeted, sublane-aligned, pipeline-friendly."""
    if block_b is None:
        # Resident (single-buffered) weights: Wl + Wg in bf16 plus small biases.
        weight_bytes = 2 * D * D * 2 + 3 * D * 4
        budget = max(vmem_limit_bytes - weight_bytes, vmem_limit_bytes // 4) // 2
        # Per-batch-row VMEM: double-buffered local input + bf16 MXU copy
        # + f32 l_emb + f32 upcast for the weighted sum + small temporaries.
        per_row = L * D * (2 * local_itemsize + 2 + 4 + 4) + (2 * L + 4 * D) * 4
        tb = budget // max(per_row, 1)
        if B >= 16:
            tb = min(tb, B // 2)        # >=2 grid steps: pipelining + v7x megacore
        tb = min(tb, 1024)
        # (tb * L multiples of 256 are preferred for v6e/v7x MXU fill; the
        # multiple-of-8 rounding below gets there for the common L=64/128.)
    else:
        tb = block_b
    tb = min(tb, B)
    if tb >= B:
        return B                        # full batch dim satisfies the (8,128) rule
    tb = max(8, (tb // 8) * 8)          # sub-B tiles must be sublane-aligned
    if tb >= B:
        return B
    for cand in range(tb, 7, -8):       # prefer tiles dividing B (no padded tail)
        if B % cand == 0:
            return cand
    return tb


@functools.partial(jax.jit, static_argnames=("block_b", "vmem_limit_bytes"))
def text_sa(local, raw_global, params, *, block_b=None,
            vmem_limit_bytes=48 * 1024 * 1024):
    """local: (B, L, D), raw_global: (B, D) -> ((B, D), (B, L))."""
    B, L, D = local.shape
    wl, bl, wg, bg, wc, bc = params
    del bc  # softmax is shift-invariant: the (1,1) common bias is a no-op.

    # Pre-cast MXU weights to bf16 once in the wrapper (not per grid step).
    wl_bf = wl.astype(jnp.bfloat16)
    wg_bf = wg.astype(jnp.bfloat16)
    wcv = wc.reshape(1, D).astype(jnp.float32)  # (D, 1) column -> lane-major row

    tb = _choose_block_b(B, L, D, block_b, vmem_limit_bytes,
                         jnp.dtype(local.dtype).itemsize)
    grid = (pl.cdiv(B, tb),)

    # Lane-dense weights output: pad the word axis to a multiple of 128.
    Lp = pl.cdiv(L, 128) * 128

    compiler_params = pltpu.CompilerParams(
        dimension_semantics=("parallel",),
        vmem_limit_bytes=vmem_limit_bytes,
    )

    new_global, weights_pad = pl.pallas_call(
        text_sa_kernel,
        out_shape=(jax.ShapeDtypeStruct((B, D), local.dtype),
                   jax.ShapeDtypeStruct((B, Lp), local.dtype)),
        grid=grid,
        in_specs=[
            pl.BlockSpec((tb, L, D), lambda i: (i, 0, 0)),   # local (tiled on B)
            pl.BlockSpec((tb, D), lambda i: (i, 0)),         # raw_global
            _const_spec((D, D)),                             # Wl (bf16, resident)
            _const_spec((1, D)),                             # bl
            _const_spec((D, D)),                             # Wg (bf16, resident)
            _const_spec((1, D)),                             # bg
            _const_spec((1, D)),                             # wc as a row
        ],
        out_specs=(pl.BlockSpec((tb, D), lambda i: (i, 0)),
                   pl.BlockSpec((tb, Lp), lambda i: (i, 0))),
        compiler_params=compiler_params,
    )(local, raw_global, wl_bf, bl, wg_bf, bg, wcv)

    weights = weights_pad if Lp == L else weights_pad[:, :L]
    return new_global, weights


def init_params(key, embed_dim):
    """Mimics TextSA.init_weights: uniform(-r, r) weights, zero biases."""
    k1, k2, k3 = jax.random.split(key, 3)
    r = (6.0 ** 0.5) / ((embed_dim + embed_dim) ** 0.5)
    wl = jax.random.uniform(k1, (embed_dim, embed_dim), jnp.float32, -r, r)
    bl = jnp.zeros((1, embed_dim), jnp.float32)
    wg = jax.random.uniform(k2, (embed_dim, embed_dim), jnp.float32, -r, r)
    bg = jnp.zeros((1, embed_dim), jnp.float32)
    rc = (6.0 ** 0.5) / ((embed_dim + 1) ** 0.5)
    wc = jax.random.uniform(k3, (embed_dim, 1), jnp.float32, -rc, rc)
    bc = jnp.zeros((1, 1), jnp.float32)
    return wl, bl, wg, bg, wc, bc


def text_sa_reference(local, raw_global, params):
    """Pure-JAX f32 reference matching the PyTorch module (dropout = identity)."""
    wl, bl, wg, bg, wc, bc = params
    l_emb = jnp.tanh(local @ wl + bl)                    # (B, L, D)
    g_emb = jnp.tanh(raw_global @ wg + bg)               # (B, D)
    common = l_emb * g_emb[:, None, :]
    scores = (common @ wc)[..., 0] + bc[0, 0]            # (B, L)
    weights = jax.nn.softmax(scores, axis=1)
    new_global = jnp.sum(weights[:, :, None] * local, axis=1)
    norm = jnp.sqrt(jnp.sum(new_global ** 2, axis=-1, keepdims=True)) + 1e-8
    return new_global / norm, weights


if __name__ == "__main__":
    B, L, D = 2, 8, 32  # batch, words, embed_dim (module uses 1024; small here)

    key = jax.random.PRNGKey(0)
    k_local, k_param = jax.random.split(key)
    local = jax.random.normal(k_local, (B, L, D), jnp.float32)
    raw_global = jnp.mean(local, axis=1)  # "raw text by averaging words"

    params = init_params(k_param, D)

    new_global, weights = text_sa(local, raw_global, params)
    jax.block_until_ready((new_global, weights))

    assert new_global.shape == (B, D)
    assert weights.shape == (B, L)
    assert bool(jnp.all(jnp.isfinite(new_global)))
    assert bool(jnp.all(jnp.isfinite(weights)))
    # softmax rows sum to ~1 (approx reciprocal in the kernel -> loose atol)
    assert bool(jnp.allclose(jnp.sum(weights, axis=1), 1.0, atol=5e-3))

    # Reference check (bf16 MXU operands + EUP approx recip -> loose tolerance).
    ref_g, ref_w = text_sa_reference(local, raw_global, params)
    assert bool(jnp.allclose(new_global, ref_g, atol=5e-2, rtol=5e-2))
    assert bool(jnp.allclose(weights, ref_w, atol=5e-2, rtol=5e-2))

    print("KERNEL_OK")
</pallas_src>

<mosaic_0001>
module attributes {stable_mosaic.version = 11 : i64} {
  func.func @text_sa_kernel(%arg0: i32, %arg1: memref<2x8x32xf32, #tpu.memory_space<vmem>>, %arg2: memref<2x32xf32, #tpu.memory_space<vmem>>, %arg3: memref<32x32xbf16, #tpu.memory_space<vmem>>, %arg4: memref<1x32xf32, #tpu.memory_space<vmem>>, %arg5: memref<32x32xbf16, #tpu.memory_space<vmem>>, %arg6: memref<1x32xf32, #tpu.memory_space<vmem>>, %arg7: memref<1x32xf32, #tpu.memory_space<vmem>>, %arg8: memref<2x32xf32, #tpu.memory_space<vmem>>, %arg9: memref<2x128xf32, #tpu.memory_space<vmem>>) attributes {dimension_semantics = [#tpu.dimension_semantics<parallel>], iteration_bounds = array<i64: 1>, scalar_prefetch = 0 : i64, scratch_operands = 0 : i64, tpu.core_type = #tpu.core_type<tc>, window_params = [{transform_indices = @transform_0, window_bounds = array<i64: 2, 8, 32>}, {transform_indices = @transform_1, window_bounds = array<i64: 2, 32>}, {pipeline_mode = #tpu.pipeline_mode<synchronous>, transform_indices = @transform_2, window_bounds = array<i64: 32, 32>}, {pipeline_mode = #tpu.pipeline_mode<synchronous>, transform_indices = @transform_3, window_bounds = array<i64: 1, 32>}, {pipeline_mode = #tpu.pipeline_mode<synchronous>, transform_indices = @transform_4, window_bounds = array<i64: 32, 32>}, {pipeline_mode = #tpu.pipeline_mode<synchronous>, transform_indices = @transform_5, window_bounds = array<i64: 1, 32>}, {pipeline_mode = #tpu.pipeline_mode<synchronous>, transform_indices = @transform_6, window_bounds = array<i64: 1, 32>}, {transform_indices = @transform_7, window_bounds = array<i64: 2, 32>}, {transform_indices = @transform_8, window_bounds = array<i64: 2, 128>}]} {
    %c0 = arith.constant 0 : index
    %c0_0 = arith.constant 0 : index
    %c0_1 = arith.constant 0 : index
    %0 = vector.load %arg1[%c0, %c0_0, %c0_1] : memref<2x8x32xf32, #tpu.memory_space<vmem>>, vector<2x8x32xf32>
    %c0_2 = arith.constant 0 : index
    %c0_3 = arith.constant 0 : index
    %1 = vector.load %arg2[%c0_2, %c0_3] : memref<2x32xf32, #tpu.memory_space<vmem>>, vector<2x32xf32>
    %2 = vector.shape_cast %0 : vector<2x8x32xf32> to vector<16x32xf32>
    %3 = arith.truncf %2 : vector<16x32xf32> to vector<16x32xbf16>
    %c0_4 = arith.constant 0 : index
    %c0_5 = arith.constant 0 : index
    %4 = vector.load %arg3[%c0_4, %c0_5] : memref<32x32xbf16, #tpu.memory_space<vmem>>, vector<32x32xbf16>
    %cst = arith.constant dense<0.000000e+00> : vector<16x32xf32>
    %5 = tpu.matmul %3, %4, %cst {dimension_numbers = #tpu.dot_dimension_numbers<[1], [0], [0], [1], [0, 0, 1, 1], [], []>} : vector<16x32xbf16>, vector<32x32xbf16>, vector<16x32xf32> -> vector<16x32xf32>
    %c0_6 = arith.constant 0 : index
    %c0_7 = arith.constant 0 : index
    %6 = vector.load %arg4[%c0_6, %c0_7] : memref<1x32xf32, #tpu.memory_space<vmem>>, vector<1x32xf32>
    %7 = vector.broadcast %6 : vector<1x32xf32> to vector<16x32xf32>
    %8 = arith.addf %5, %7 : vector<16x32xf32>
    %9 = math.tanh %8 : vector<16x32xf32>
    %10 = vector.shape_cast %9 : vector<16x32xf32> to vector<2x8x32xf32>
    %11 = arith.truncf %1 : vector<2x32xf32> to vector<2x32xbf16>
    %c0_8 = arith.constant 0 : index
    %c0_9 = arith.constant 0 : index
    %12 = vector.load %arg5[%c0_8, %c0_9] : memref<32x32xbf16, #tpu.memory_space<vmem>>, vector<32x32xbf16>
    %cst_10 = arith.constant dense<0.000000e+00> : vector<2x32xf32>
    %13 = tpu.matmul %11, %12, %cst_10 {dimension_numbers = #tpu.dot_dimension_numbers<[1], [0], [0], [1], [0, 0, 1, 1], [], []>} : vector<2x32xbf16>, vector<32x32xbf16>, vector<2x32xf32> -> vector<2x32xf32>
    %c0_11 = arith.constant 0 : index
    %c0_12 = arith.constant 0 : index
    %14 = vector.load %arg6[%c0_11, %c0_12] : memref<1x32xf32, #tpu.memory_space<vmem>>, vector<1x32xf32>
    %15 = vector.broadcast %14 : vector<1x32xf32> to vector<2x32xf32>
    %16 = arith.addf %13, %15 : vector<2x32xf32>
    %17 = math.tanh %16 : vector<2x32xf32>
    %c0_13 = arith.constant 0 : index
    %c0_14 = arith.constant 0 : index
    %18 = vector.load %arg7[%c0_13, %c0_14] : memref<1x32xf32, #tpu.memory_space<vmem>>, vector<1x32xf32>
    %19 = vector.broadcast %18 : vector<1x32xf32> to vector<2x32xf32>
    %20 = arith.mulf %17, %19 : vector<2x32xf32>
    %21 = vector.shape_cast %20 : vector<2x32xf32> to vector<2x1x32xf32>
    %22 = vector.broadcast %21 : vector<2x1x32xf32> to vector<2x8x32xf32>
    %23 = arith.mulf %10, %22 : vector<2x8x32xf32>
    %cst_15 = arith.constant dense<0.000000e+00> : vector<2x8xf32>
    %24 = vector.multi_reduction <add>, %23, %cst_15 [2] : vector<2x8x32xf32> to vector<2x8xf32>
    %cst_16 = arith.constant dense<0xFF800000> : vector<2xf32>
    %25 = vector.multi_reduction <maximumf>, %24, %cst_16 [1] : vector<2x8xf32> to vector<2xf32>
    %26 = vector.shape_cast %25 : vector<2xf32> to vector<2x1xf32>
    %27 = vector.broadcast %26 : vector<2x1xf32> to vector<2x8xf32>
    %28 = arith.subf %24, %27 : vector<2x8xf32>
    %29 = math.exp %28 : vector<2x8xf32>
    %cst_17 = arith.constant dense<0.000000e+00> : vector<2xf32>
    %30 = vector.multi_reduction <add>, %29, %cst_17 [1] : vector<2x8xf32> to vector<2xf32>
    %31 = vector.shape_cast %30 : vector<2xf32> to vector<2x1xf32>
    %32 = tpu.reciprocal %31 {approx = true} : vector<2x1xf32> -> vector<2x1xf32>
    %33 = vector.broadcast %32 : vector<2x1xf32> to vector<2x8xf32>
    %34 = arith.mulf %29, %33 : vector<2x8xf32>
    %35 = vector.shape_cast %34 : vector<2x8xf32> to vector<2x8x1xf32>
    %36 = vector.broadcast %35 : vector<2x8x1xf32> to vector<2x8x32xf32>
    %37 = arith.mulf %36, %0 : vector<2x8x32xf32>
    %cst_18 = arith.constant dense<0.000000e+00> : vector<2x32xf32>
    %38 = vector.multi_reduction <add>, %37, %cst_18 [1] : vector<2x8x32xf32> to vector<2x32xf32>
    %39 = arith.mulf %38, %38 : vector<2x32xf32>
    %cst_19 = arith.constant dense<0.000000e+00> : vector<2xf32>
    %40 = vector.multi_reduction <add>, %39, %cst_19 [1] : vector<2x32xf32> to vector<2xf32>
    %41 = vector.shape_cast %40 : vector<2xf32> to vector<2x1xf32>
    %42 = math.sqrt %41 : vector<2x1xf32>
    %cst_20 = arith.constant 9.99999993E-9 : f32
    %43 = vector.broadcast %cst_20 : f32 to vector<2x1xf32>
    %44 = arith.addf %42, %43 : vector<2x1xf32>
    %45 = tpu.reciprocal %44 {approx = true} : vector<2x1xf32> -> vector<2x1xf32>
    %46 = vector.broadcast %45 : vector<2x1xf32> to vector<2x32xf32>
    %47 = arith.mulf %38, %46 : vector<2x32xf32>
    %c0_21 = arith.constant 0 : index
    %c0_22 = arith.constant 0 : index
    %48 = vector.load %arg8[%c0_21, %c0_22] : memref<2x32xf32, #tpu.memory_space<vmem>>, vector<2x32xf32>
    tpu.vector_store %arg8[%c0_21, %c0_22], %47 {strides = array<i32>} : memref<2x32xf32, #tpu.memory_space<vmem>>, vector<2x32xf32>,
    %cst_23 = arith.constant 0.000000e+00 : f32
    %49 = vector.broadcast %cst_23 : f32 to vector<2x128xf32>
    %c0_24 = arith.constant 0 : index
    %c0_25 = arith.constant 0 : index
    %50 = vector.load %arg9[%c0_24, %c0_25] : memref<2x128xf32, #tpu.memory_space<vmem>>, vector<2x128xf32>
    tpu.vector_store %arg9[%c0_24, %c0_25], %49 {strides = array<i32>} : memref<2x128xf32, #tpu.memory_space<vmem>>, vector<2x128xf32>,
    %c0_26 = arith.constant 0 : index
    %c0_27 = arith.constant 0 : index
    %51 = vector.load %arg9[%c0_26, %c0_27] : memref<2x128xf32, #tpu.memory_space<vmem>>, vector<2x8xf32>
    tpu.vector_store %arg9[%c0_26, %c0_27], %34 {strides = array<i32>} : memref<2x128xf32, #tpu.memory_space<vmem>>, vector<2x8xf32>,
    return
  }
  func.func @transform_0(%arg0: i32) -> (i32, i32, i32) {
    %c0_i32 = arith.constant 0 : i32
    %c0_i32_0 = arith.constant 0 : i32
    %c0_i32_1 = arith.constant 0 : i32
    return %arg0, %c0_i32, %c0_i32_0 : i32, i32, i32
  }
  func.func @transform_1(%arg0: i32) -> (i32, i32) {
    %c0_i32 = arith.constant 0 : i32
    %c0_i32_0 = arith.constant 0 : i32
    return %arg0, %c0_i32 : i32, i32
  }
  func.func @transform_2(%arg0: i32) -> (i32, i32) {
    %c0_i32 = arith.constant 0 : i32
    %c0_i32_0 = arith.constant 0 : i32
    %c0_i32_1 = arith.constant 0 : i32
    return %c0_i32, %c0_i32_0 : i32, i32
  }
  func.func @transform_3(%arg0: i32) -> (i32, i32) {
    %c0_i32 = arith.constant 0 : i32
    %c0_i32_0 = arith.constant 0 : i32
    %c0_i32_1 = arith.constant 0 : i32
    return %c0_i32, %c0_i32_0 : i32, i32
  }
  func.func @transform_4(%arg0: i32) -> (i32, i32) {
    %c0_i32 = arith.constant 0 : i32
    %c0_i32_0 = arith.constant 0 : i32
    %c0_i32_1 = arith.constant 0 : i32
    return %c0_i32, %c0_i32_0 : i32, i32
  }
  func.func @transform_5(%arg0: i32) -> (i32, i32) {
    %c0_i32 = arith.constant 0 : i32
    %c0_i32_0 = arith.constant 0 : i32
    %c0_i32_1 = arith.constant 0 : i32
    return %c0_i32, %c0_i32_0 : i32, i32
  }
  func.func @transform_6(%arg0: i32) -> (i32, i32) {
    %c0_i32 = arith.constant 0 : i32
    %c0_i32_0 = arith.constant 0 : i32
    %c0_i32_1 = arith.constant 0 : i32
    return %c0_i32, %c0_i32_0 : i32, i32
  }
  func.func @transform_7(%arg0: i32) -> (i32, i32) {
    %c0_i32 = arith.constant 0 : i32
    %c0_i32_0 = arith.constant 0 : i32
    return %arg0, %c0_i32 : i32, i32
  }
  func.func @transform_8(%arg0: i32) -> (i32, i32) {
    %c0_i32 = arith.constant 0 : i32
    %c0_i32_0 = arith.constant 0 : i32
    return %arg0, %c0_i32 : i32, i32
  }
}

</mosaic_0001>

<llo_original>
// kernel: text_sa.1
$region0: #{text_sa.1}
  #allocation0 [shape = 'u32[]', space=smem, size = 0x4, offset = 0x4, fixed_abs, tag = 'smem constant byte address 0x4 - core index']
  #allocation1 [shape = 'u32[144,128]{1,0:T(1,128)}', space=vmem, size = 0x12000, scoped, tag = 'internal scratch']
  %s0 = inlined_call_operand.vmem [shape: f32[2,8,32], index: 0, kind: input, shape index: {}]
  %s1 = inlined_call_operand.vmem [shape: f32[2,32], index: 1, kind: input, shape index: {}]
  %s2 = inlined_call_operand.vmem [shape: bf16[32,32], index: 2, kind: input, shape index: {}]
  %s3 = inlined_call_operand.vmem [shape: f32[1,32], index: 3, kind: input, shape index: {}]
  %s4 = inlined_call_operand.vmem [shape: bf16[32,32], index: 4, kind: input, shape index: {}]
  %s5 = inlined_call_operand.vmem [shape: f32[1,32], index: 5, kind: input, shape index: {}]
  %s6 = inlined_call_operand.vmem [shape: f32[1,32], index: 6, kind: input, shape index: {}]
  %s7 = inlined_call_operand.hbm [shape: f32[2,32], index: 7, kind: output, shape index: {0}]
  %s8 = inlined_call_operand.hbm [shape: f32[2,128], index: 8, kind: output, shape index: {1}]
  %9 = xla_tuple %s7, %s8
  %s10 = sld [smem:[#allocation0]]
  $region46: #{text_sa.1} parent=0
    _
  %s12 = ssub.s32 1, %s10
  %s13 = scalar_select 0, %s12, %s10
  $region1: #{text_sa.1} parent=0
    #allocation2 [shape = 'u8[1024]{0}', space=vmem, size = 0x400, scoped, tag = 'output window, operand 0, single buffered']
    #allocation3 [shape = 's32[1]{0}', space=sflag, size = 0x4, scoped, tag = 'scoped memory for text_sa.1']
    #allocation4 [shape = 'u8[1024]{0}', space=vmem, size = 0x400, scoped, tag = 'output window, operand 1, single buffered']
    #allocation5 [shape = 's32[1]{0}', space=sflag, size = 0x4, scoped, tag = 'scoped memory for text_sa.1']
    %14 = vsyncpa [#allocation3], 0
    %15 = vsyncpa [#allocation5], 0
    // Predicated region
    $region2: #{text_sa.1} parent=1 // pred_check
      _
    $region3: #{text_sa.1} parent=1 // pred_check_branch
      %17 = sbr.rel (0) target = $region5
    $region4: #{text_sa.1} parent=1 // pred_region
      _
    $region5: #{text_sa.1} parent=1 // pred_fallthru
      _
    // Predicated region
    $region6: #{text_sa.1} parent=1 // pred_check
      _
    $region7: #{text_sa.1} parent=1 // pred_check_branch
      %19 = sbr.rel (0) target = $region9
    $region8: #{text_sa.1} parent=1 // pred_region
      _
    $region9: #{text_sa.1} parent=1 // pred_fallthru
      _
    // Predicated region
    $region10: #{text_sa.1} parent=1 // pred_check
      _
    $region11: #{text_sa.1} parent=1 // pred_check_branch
      %21 = sbr.rel (0) target = $region13
    $region12: #{text_sa.1} parent=1 // pred_region
      _
    $region13: #{text_sa.1} parent=1 // pred_fallthru
      _
    // Predicated region
    $region14: #{text_sa.1} parent=1 // pred_check
      _
    $region15: #{text_sa.1} parent=1 // pred_check_branch
      %23 = sbr.rel (0) target = $region17
    $region16: #{text_sa.1} parent=1 // pred_region
      _
    $region17: #{text_sa.1} parent=1 // pred_fallthru
      _
    // Predicated region
    $region18: #{text_sa.1} parent=1 // pred_check
      _
    $region19: #{text_sa.1} parent=1 // pred_check_branch
      %25 = sbr.rel (0) target = $region21
    $region20: #{text_sa.1} parent=1 // pred_region
      _
    $region21: #{text_sa.1} parent=1 // pred_fallthru
      _
    // Predicated region
    $region22: #{text_sa.1} parent=1 // pred_check
      _
    $region23: #{text_sa.1} parent=1 // pred_check_branch
      %27 = sbr.rel (0) target = $region25
    $region24: #{text_sa.1} parent=1 // pred_region
      _
    $region25: #{text_sa.1} parent=1 // pred_fallthru
      _
    // Predicated region
    $region26: #{text_sa.1} parent=1 // pred_check
      _
    $region27: #{text_sa.1} parent=1 // pred_check_branch
      %29 = sbr.rel (0) target = $region29
    $region28: #{text_sa.1} parent=1 // pred_region
      _
    $region29: #{text_sa.1} parent=1 // pred_fallthru
      _
    %v31 = vld [vmem:[%s0] sm:$0xff]
    %v32 = vld [vmem:[%s0 + $0x8] sm:$0xff]
    %v33 = vld [vmem:[%s1] sm:$0x3]
    %v34 = vpack.c.bf16 %v32, %v31
    %v35 = vld [vmem:[%s2] sm:$0xf]
    %v36 = vld [vmem:[%s2 + $0x4] sm:$0xf]
    %v37 = vld [vmem:[%s2 + $0x8] sm:$0xf]
    %v38 = vld [vmem:[%s2 + $0xc] sm:$0xf]
    %v39 = vld [vmem:[%s3] sm:$0x1]
    %v41 = vlaneseq
    %v42 = vshrl.u32 %v41, 7
    %v43 = vsub.s32 0, %v42
    %v44 = vrot.slane %v39, %v43
    %v50 = vunpack.c.l.b16 %v35
    %v51 = vunpack.c.l.b16 %v36
    %v52 = vunpack.c.l.b16 %v37
    %v53 = vunpack.c.l.b16 %v38
    %v54 = vpack.c.b16 %v51, %v50
    %v55 = vpack.c.b16 %v53, %v52
    %vm58 = vcmask 261120
    %v60 = vsel %vm58, %v34, 0
    %62 = vmatprep.subr.bf16.mxu0 0
    %63 = vmatpush1.bf16.msra.mxu0 %v54
    %64 = vmatprep.subr.bf16.mxu0 0
    %65 = vmatpush1.bf16.msra.mxu0 %v55
    %66 = vmatprep.subr.bf16.mxu0 0
    %67 = vmatpush1.bf16.msra.mxu0 0
    %68 = vmatprep.subr.bf16.mxu0 0
    %69 = vmatpush1.bf16.msra.mxu0 0
    %70 = vmatprep.subr.bf16.mxu0 0
    %71 = vmatpush1.bf16.msra.mxu0 0
    %72 = vmatprep.subr.bf16.mxu0 0
    %73 = vmatpush1.bf16.msra.mxu0 0
    %74 = vmatprep.subr.bf16.mxu0 0
    %75 = vmatpush1.bf16.msra.mxu0 0
    %76 = vmatprep.subr.bf16.mxu0 0
    %77 = vmatpush1.bf16.msra.mxu0 0
    %78 = vmatprep.subr.bf16.mxu0 0
    %79 = vmatpush1.bf16.msra.mxu0 0
    %80 = vmatprep.subr.bf16.mxu0 0
    %81 = vmatpush1.bf16.msra.mxu0 0
    %82 = vmatprep.subr.bf16.mxu0 0
    %83 = vmatpush1.bf16.msra.mxu0 0
    %84 = vmatprep.subr.bf16.mxu0 0
    %85 = vmatpush1.bf16.msra.mxu0 0
    %86 = vmatprep.subr.bf16.mxu0 0
    %87 = vmatpush1.bf16.msra.mxu0 0
    %88 = vmatprep.subr.bf16.mxu0 0
    %89 = vmatpush1.bf16.msra.mxu0 0
    %90 = vmatprep.subr.bf16.mxu0 0
    %91 = vmatpush1.bf16.msra.mxu0 0
    %92 = vmatprep.subr.bf16.mxu0 0
    %93 = vmatpush1.bf16.msra.mxu0 0
    %94 = vmatprep.mubr.bf16.mxu0 0
    %95 = vmatmul.mubr.bf16.gmra.mrb[0].mxu0 %v60
    %v96 = vpop.f32.mrb[0].mxu0
    %v97 = vadd.f32 %v44, %v96
    %v98 = vpop.f32.mrb[0].mxu0
    %v99 = vpop.f32.mrb[0].mxu0
    %v100 = vadd.f32 %v44, %v99
    %v101 = vpop.f32.mrb[0].mxu0
    %102 = vdwg.mxu0
    %v103 = vtanh.pop %v97
    %v104 = vtanh.pop %v100
    %v105 = vpack.c.bf16 %v33, %v33
    %v106 = vld [vmem:[%s4] sm:$0xf]
    %v107 = vld [vmem:[%s4 + $0x4] sm:$0xf]
    %v108 = vld [vmem:[%s4 + $0x8] sm:$0xf]
    %v109 = vld [vmem:[%s4 + $0xc] sm:$0xf]
    %v110 = vld [vmem:[%s5] sm:$0x1]
    %v112 = vlaneseq
    %v113 = vshrl.u32 %v112, 7
    %v114 = vsub.s32 0, %v113
    %v115 = vrot.slane %v110, %v114
    %v121 = vunpack.c.l.b16 %v106
    %v122 = vunpack.c.l.b16 %v107
    %v123 = vunpack.c.l.b16 %v108
    %v124 = vunpack.c.l.b16 %v109
    %v125 = vpack.c.b16 %v122, %v121
    %v126 = vpack.c.b16 %v124, %v123
    %v130 = vsel %vm58, %v105, 0
    %132 = vmatprep.subr.bf16.mxu0 0
    %133 = vmatpush1.bf16.msra.mxu0 %v125
    %134 = vmatprep.subr.bf16.mxu0 0
    %135 = vmatpush1.bf16.msra.mxu0 %v126
    %136 = vmatprep.subr.bf16.mxu0 0
    %137 = vmatpush1.bf16.msra.mxu0 0
    %138 = vmatprep.subr.bf16.mxu0 0
    %139 = vmatpush1.bf16.msra.mxu0 0
    %140 = vmatprep.subr.bf16.mxu0 0
    %141 = vmatpush1.bf16.msra.mxu0 0
    %142 = vmatprep.subr.bf16.mxu0 0
    %143 = vmatpush1.bf16.msra.mxu0 0
    %144 = vmatprep.subr.bf16.mxu0 0
    %145 = vmatpush1.bf16.msra.mxu0 0
    %146 = vmatprep.subr.bf16.mxu0 0
    %147 = vmatpush1.bf16.msra.mxu0 0
    %148 = vmatprep.subr.bf16.mxu0 0
    %149 = vmatpush1.bf16.msra.mxu0 0
    %150 = vmatprep.subr.bf16.mxu0 0
    %151 = vmatpush1.bf16.msra.mxu0 0
    %152 = vmatprep.subr.bf16.mxu0 0
    %153 = vmatpush1.bf16.msra.mxu0 0
    %154 = vmatprep.subr.bf16.mxu0 0
    %155 = vmatpush1.bf16.msra.mxu0 0
    %156 = vmatprep.subr.bf16.mxu0 0
    %157 = vmatpush1.bf16.msra.mxu0 0
    %158 = vmatprep.subr.bf16.mxu0 0
    %159 = vmatpush1.bf16.msra.mxu0 0
    %160 = vmatprep.subr.bf16.mxu0 0
    %161 = vmatpush1.bf16.msra.mxu0 0
    %162 = vmatprep.subr.bf16.mxu0 0
    %163 = vmatpush1.bf16.msra.mxu0 0
    %164 = vmatprep.mubr.bf16.mxu0 0
    %165 = vmatmul.mubr.bf16.gmra.mrb[0].mxu0 %v130
    %v166 = vpop.f32.mrb[0].mxu0
    %v167 = vadd.f32 %v115, %v166
    %v168 = vpop.f32.mrb[0].mxu0
    %v169 = vpop.f32.mrb[0].mxu0
    %v170 = vpop.f32.mrb[0].mxu0
    %171 = vdwg.mxu0
    %v172 = vtanh.pop %v167
    %v173 = vld [vmem:[%s6] sm:$0x1]
    %v175 = vlaneseq
    %v176 = vshrl.u32 %v175, 7
    %v177 = vsub.s32 0, %v176
    %v178 = vrot.slane %v173, %v177
    %v180 = vmul.f32 %v172, %v178
    %v183 = vunpack.c.l.s4 1966171168
    %v184 = vunpack.c.0.s8 %v183
    %v185 = vlaneseq
    %v186 = vshrl.u32 %v185, 7
    %v187 = vsub.s32 %v184, %v186
    %v188 = vrot.slane %v180, %v187
    %v189 = vcombine.high %v188, %v188
    %v191 = vunpack.c.l.s4 1966171168
    %v192 = vunpack.c.0.s8 %v191
    %v193 = vlaneseq
    %v194 = vshrl.u32 %v193, 7
    %v195 = vsub.s32 %v192, %v194
    %v196 = vrot.slane %v188, %v195
    %v198 = vunpack.c.l.s4 1966171168
    %v199 = vunpack.c.0.s8 %v198
    %v200 = vlaneseq
    %v201 = vshrl.u32 %v200, 7
    %v202 = vsub.s32 %v199, %v201
    %v203 = vrot.slane %v189, %v202
    %v204 = vlaneseq
    %v205 = vshrl.u32 %v204, 7
    %v206 = vsub.s32 0, %v205
    %v207 = vrot.slane %v196, %v206
    %v208 = vlaneseq
    %v209 = vshrl.u32 %v208, 7
    %v210 = vsub.s32 0, %v209
    %v211 = vrot.slane %v203, %v210
    %v214 = vmul.f32 %v103, %v207
    %v215 = vmul.f32 %v104, %v211
    %v216 = vsel %vm58, %v214, 0.0
    %217 = vadd.xlane.f32.xlu0 %v216
    %v218 = vpop.xlane.xlu0 %217
    %v219 = vsel %vm58, %v215, 0.0
    %220 = vadd.xlane.f32.xlu0 %v219
    %v221 = vpop.xlane.xlu0 %220
    %v224 = vlaneseq
    %v225 = vand.u32 %v224, 127
    %v226 = vlaneseq
    %v227 = vshrl.u32 %v226, 7
    %v228 = vsub.s32 %v225, %v227
    %v229 = vrot.slane %v218, %v228
    %v230 = vlaneseq
    %v231 = vshrl.u32 %v230, 7
    %v232 = vsub.s32 %v225, %v231
    %v233 = vrot.slane %v221, %v232
    %vm234 = vcmask 1041409
    %v235 = vsel %vm234, %v233, %v229
    %vm237 = vcmask 58368
    %v238 = vsel %vm237, %v235, -inf
    %239 = vmax.xlane.f32.xlu0 %v238
    %v240 = vpop.xlane.xlu0 %239
    %v242 = vlaneseq
    %v243 = vshrl.u32 %v242, 7
    %v244 = vsub.s32 0, %v243
    %v245 = vrot.slane %v240, %v244
    %v246 = vlaneseq
    %v247 = vshrl.u32 %v246, 7
    %v248 = vsub.s32 1, %v247
    %v249 = vrot.slane %v240, %v248
    %v252 = vsub.f32 %v218, %v245
    %v253 = vsub.f32 %v221, %v249
    %v254 = vmul.f32 %v252, 1.442695
    %v255 = vpow.pop %v254
    %v256 = vmul.f32 %v253, 1.442695
    %v257 = vpow.pop %v256
    %260 = vset.pattern.permute.xlu0 0
    %261 = vperm.xlu0 %260, %v255
    %v262 = vpop.permute.xlu0 %261
    %263 = vset.pattern.permute.xlu0 0
    %264 = vperm.xlu0 %263, %v257
    %v265 = vpop.permute.xlu0 %264
    %v266 = vlaneseq
    %v267 = vshrl.u32 %v266, 7
    %v268 = vsub.s32 %v225, %v267
    %v269 = vrot.slane %v262, %v268
    %v270 = vlaneseq
    %v271 = vshrl.u32 %v270, 7
    %v272 = vsub.s32 %v225, %v271
    %v273 = vrot.slane %v265, %v272
    %v274 = vsel %vm234, %v273, %v269
    %v276 = vsel %vm237, %v274, 0.0
    %277 = vadd.xlane.f32.xlu0 %v276
    %v278 = vpop.xlane.xlu0 %277
    %v279 = vrcp.pop %v278
    %v281 = vlaneseq
    %v282 = vshrl.u32 %v281, 7
    %v283 = vsub.s32 0, %v282
    %v284 = vrot.slane %v279, %v283
    %v285 = vlaneseq
    %v286 = vshrl.u32 %v285, 7
    %v287 = vsub.s32 1, %v286
    %v288 = vrot.slane %v279, %v287
    %v291 = vmul.f32 %v255, %v284
    %v292 = vmul.f32 %v257, %v288
    %294 = vset.pattern.permute.xlu0 0
    %295 = vperm.xlu0 %294, %v291
    %v296 = vpop.permute.xlu0 %295
    %299 = vset.pattern.permute.xlu0 0
    %300 = vperm.xlu0 %299, %v292
    %v301 = vpop.permute.xlu0 %300
    %v303 = vmul.f32 %v296, %v31
    %v304 = vmul.f32 %v301, %v32
    %v305 = vsel %vm58, %v303, 0.0
    %v306 = vrot.slane %v305, 4
    %v307 = vadd.f32 %v305, %v306
    %v308 = vrot.slane %v307, 2
    %v309 = vadd.f32 %v307, %v308
    %v310 = vrot.slane %v309, 1
    %v311 = vadd.f32 %v309, %v310
    %v312 = vsel %vm58, %v304, 0.0
    %v313 = vrot.slane %v312, 4
    %v314 = vadd.f32 %v312, %v313
    %v315 = vrot.slane %v314, 2
    %v316 = vadd.f32 %v314, %v315
    %v317 = vrot.slane %v316, 1
    %v318 = vadd.f32 %v316, %v317
    %v319 = vmul.f32 %v311, %v311
    %v320 = vmul.f32 %v318, %v318
    %v323 = vsel %vm234, %v320, %v319
    %vm325 = vcmask 254976
    %v326 = vsel %vm325, %v323, 0.0
    %327 = vadd.xlane.f32.xlu0 %v326
    %v328 = vpop.xlane.xlu0 %327
    %v329 = vrsqrt.pop %v328
    %v330 = vmul.f32 %v328, %v329
    %vm331 = vcmp.eq.f32.partialorder %v328, inf
    %v332 = vsel %vm331, %v328, %v330
    %vm333 = vcmp.eq.f32.partialorder %v328, 0.0
    %v334 = vand.u32 %v328, 2147483648
    %v335 = vsel %vm333, %v334, %v332
    %v336 = vadd.f32 %v335, 1e-08
    %v337 = vrcp.pop %v336
    %v339 = vrot.slane %v337, 1
    %v342 = vmul.f32 %v311, %v337
    %v343 = vmul.f32 %v318, %v339
    %v346 = vrot.slane %v343, 7
    %v347 = vsel %vm234, %v346, %v342
    %349 = vst.msk [vmem:[#allocation2] sm:$0x3] %vm325, %v347
    %350 = vst [vmem:[#allocation4] sm:$0x3] 0.0
    %v351 = vlaneseq
    %v352 = vshrl.u32 %v351, 7
    %v353 = vsub.s32 %v225, %v352
    %v354 = vrot.slane %v296, %v353
    %v355 = vlaneseq
    %v356 = vshrl.u32 %v355, 7
    %v357 = vsub.s32 %v225, %v356
    %v358 = vrot.slane %v301, %v357
    %v359 = vsel %vm234, %v358, %v354
    %361 = vst.msk [vmem:[#allocation4] sm:$0x3] %vm237, %v359
    // Predicated region
    $region30: #{text_sa.1} parent=1 // pred_check
      _
    $region31: #{text_sa.1} parent=1 // pred_check_branch
      %363 = sbr.rel (0) target = $region33
    $region32: #{text_sa.1} parent=1 // pred_region
      %s365 = ssub.s32 32, 32
      %366 = vsyncadd [#allocation3], %s365
      %s368 = sshll.u32 [#allocation2], 4
      %s369 = int_to_ptr.vmem [resolvable:$true] %s368
      %371 = dma.vmem_to_hbm [thread:$0]  %s369, 32, %s7, [#allocation3]
    $region33: #{text_sa.1} parent=1 // pred_fallthru
      _
    // Predicated region
    $region34: #{text_sa.1} parent=1 // pred_check
      _
    $region35: #{text_sa.1} parent=1 // pred_check_branch
      %373 = sbr.rel (0) target = $region37
    $region36: #{text_sa.1} parent=1 // pred_region
      %s375 = ssub.s32 32, 32
      %376 = vsyncadd [#allocation5], %s375
      %s378 = sshll.u32 [#allocation4], 4
      %s379 = int_to_ptr.vmem [resolvable:$true] %s378
      %381 = dma.vmem_to_hbm [thread:$0]  %s379, 32, %s8, [#allocation5]
    $region37: #{text_sa.1} parent=1 // pred_fallthru
      _
    // Predicated region
    $region38: #{text_sa.1} parent=1 // pred_check
      _
    $region39: #{text_sa.1} parent=1 // pred_check_branch
      %383 = sbr.rel (0) target = $region41
    $region40: #{text_sa.1} parent=1 // pred_region
      %384 = dma.done [#allocation3], 32
    $region41: #{text_sa.1} parent=1 // pred_fallthru
      _
    // Predicated region
    $region42: #{text_sa.1} parent=1 // pred_check
      _
    $region43: #{text_sa.1} parent=1 // pred_check_branch
      %386 = sbr.rel (0) target = $region45
    $region44: #{text_sa.1} parent=1 // pred_region
      %387 = dma.done [#allocation5], 32
    $region45: #{text_sa.1} parent=1 // pred_fallthru
      _
    %388 = vsyncpa [#allocation3], 1
    %389 = vsyncpa [#allocation5], 1

</llo_original>
